<compile_context>
chip_gen: v5e
topology: v5e:2x2
jax: 0.10.0
libtpu: 0.0.40
codegen_flags: <defaults>
</compile_context>

<pallas_src>
import jax
import jax.numpy as jnp
import numpy as np
from jax.experimental import pallas as pl
from jax.experimental.pallas import tpu as pltpu

# ---------------- hyper-params (hps), small stand-ins ----------------
TOP_OUTPUT = 3              # hps.top_output  -> number of independent task branches
BOTTOM_OUTPUT = 40          # hps.bottom_output
D_IN = BOTTOM_OUTPUT + 1    # MLPBlock input size = bottom_output + 1 = 41
HIDDEN_DIMS = (32, 48)      # hps.hidden_dims (small stand-in for [200, 300])
TOP_LAYERS = 2              # hps.top_layers  -> readout: 48 -> 24 -> 12 -> 1
BATCH = 8
BN_EPS = 1e-5
LANE = 128
SUBLANE = 8


def _rup(n, m):
    return ((n + m - 1) // m) * m


# Per-task layer chain (Linear -> BN(eval) -> ReLU per step), then final Linear -> 1.
_PER_TASK_DIMS = [D_IN, HIDDEN_DIMS[0], HIDDEN_DIMS[1]]
for _ in range(TOP_LAYERS):
    _PER_TASK_DIMS.append(_PER_TASK_DIMS[-1] // 2)     # 41 -> 32 -> 48 -> 24 -> 12
_N_BN_LAYERS = len(_PER_TASK_DIMS) - 1                  # 4 Linear+BN+ReLU layers
_N_LAYERS = _N_BN_LAYERS + 1                             # + final Linear (-> 1 per task)

# Fused (all-task) layer widths: layer0 concatenates tasks, deeper layers block-diag.
_FUSED_OUT = [TOP_OUTPUT * d for d in _PER_TASK_DIMS[1:]] + [TOP_OUTPUT]  # [96,144,72,36,3]
_PAD_OUT = [_rup(c, LANE) for c in _FUSED_OUT]           # [128, 256, 128, 128, 128]
_PAD_IN = [D_IN] + _PAD_OUT[:-1]                          # [41, 128, 256, 128, 128]
OUT_PAD = _PAD_OUT[-1]                                    # lane-dense output width


def _build_layout():
    """Row layout of the single packed parameter buffer.

    Each weight / bias starts on an 8-row (sublane) boundary at column 0; all
    column widths are multiples of 128 lanes, so every in-kernel slice is a
    tile-aligned static view.
    """
    layout = []
    off = 0
    for fi, fo in zip(_PAD_IN, _PAD_OUT):
        w_row = off
        off += _rup(fi, SUBLANE)
        b_row = off
        off += SUBLANE
        layout.append((w_row, fi, b_row, fo))
    return layout, off, max(_PAD_OUT)


_LAYOUT, P_ROWS, P_COLS = _build_layout()


# ---------------------------------------------------------------------------
# Kernel: one batch tile per grid step; all tasks fused; params VMEM-resident.
# ---------------------------------------------------------------------------
def _fused_mlp_kernel(x_ref, p_ref, o_ref):
    h = x_ref[...]                                         # (TM, D_IN)
    for li, (w_row, fi, b_row, fo) in enumerate(_LAYOUT):
        w = p_ref[w_row:w_row + fi, 0:fo]                  # static slice -> free view
        b = p_ref[b_row:b_row + 1, 0:fo]
        z = jnp.dot(h, w, preferred_element_type=jnp.float32) + b
        # BN already folded; Dropout == identity in eval; no ReLU on final linear.
        h = z if li == _N_LAYERS - 1 else jnp.maximum(z, 0.0)
    o_ref[...] = h                                         # (TM, OUT_PAD) lane-dense


def top_independent_net(x, packed):
    """Pallas forward of TopIndependentNet.  x: (B, bottom_output+1) -> (B, top_output)."""
    B = x.shape[0]
    TM = min(512, _rup(B, SUBLANE))                        # batch tile, multiple of 8
    B_pad = _rup(B, TM)
    if B_pad != B:
        x = jnp.pad(x, ((0, B_pad - B), (0, 0)))
    grid = (B_pad // TM,)

    flops = 2 * B_pad * sum(fi * fo for fi, fo in zip(_PAD_IN, _PAD_OUT))
    bytes_accessed = 4 * (int(x.size) + int(packed.size) + B_pad * OUT_PAD)

    out = pl.pallas_call(
        _fused_mlp_kernel,
        out_shape=jax.ShapeDtypeStruct((B_pad, OUT_PAD), jnp.float32),
        grid_spec=pltpu.PrefetchScalarGridSpec(
            num_scalar_prefetch=0,
            grid=grid,
            in_specs=[
                pl.BlockSpec((TM, D_IN), lambda i: (i, 0)),            # batch tile
                pl.BlockSpec((P_ROWS, P_COLS), lambda i: (0, 0)),       # resident params
            ],
            out_specs=pl.BlockSpec((TM, OUT_PAD), lambda i: (i, 0)),
        ),
        compiler_params=pltpu.CompilerParams(
            dimension_semantics=("parallel",)),                          # 2 TCs on v7x
        cost_estimate=pl.CostEstimate(flops=flops, transcendentals=0,
                                      bytes_accessed=bytes_accessed),
    )(x, packed)
    return out[:B, :TOP_OUTPUT]                            # == torch.cat(..., dim=1)


# ---------------------------------------------------------------------------
# Parameter construction (per-task, unfolded) and host-side fold / fuse / pack.
# ---------------------------------------------------------------------------
def init_params(key):
    """Synthetic per-task params with NON-trivial BatchNorm statistics."""
    T = TOP_OUTPUT
    params = {"layers": [], "final": None}
    for li in range(_N_BN_LAYERS):
        fi, fo = _PER_TASK_DIMS[li], _PER_TASK_DIMS[li + 1]
        key, kw, kb, kg, kbe, km, kv = jax.random.split(key, 7)
        bound = 1.0 / np.sqrt(fi)
        params["layers"].append(dict(
            W=jax.random.uniform(kw, (T, fi, fo), jnp.float32, -bound, bound),
            b=jax.random.uniform(kb, (T, fo), jnp.float32, -bound, bound),
            gamma=1.0 + 0.1 * jax.random.normal(kg, (T, fo), jnp.float32),
            beta=0.1 * jax.random.normal(kbe, (T, fo), jnp.float32),
            mean=0.1 * jax.random.normal(km, (T, fo), jnp.float32),
            var=jax.random.uniform(kv, (T, fo), jnp.float32, 0.5, 1.5),
        ))
    fi = _PER_TASK_DIMS[-1]
    key, kw, kb = jax.random.split(key, 3)
    bound = 1.0 / np.sqrt(fi)
    params["final"] = dict(
        W=jax.random.uniform(kw, (TOP_OUTPUT, fi, 1), jnp.float32, -bound, bound),
        b=jax.random.uniform(kb, (TOP_OUTPUT, 1), jnp.float32, -bound, bound))
    return params


def fuse_and_pack_params(params):
    """Fold eval-mode BN, fuse tasks (concat / block-diag), pad to 128-lane widths,
    and pack everything into ONE (P_ROWS, P_COLS) tile-aligned buffer.

    BN fold convention (BatchNorm1d eval):
        s  = gamma / sqrt(running_var + eps)
        Wf = W * s
        bf = (b - running_mean) * s + beta
    """
    T = TOP_OUTPUT
    folded = []
    for lp in params["layers"]:
        W = np.asarray(lp["W"], np.float32)
        b = np.asarray(lp["b"], np.float32)
        s = np.asarray(lp["gamma"], np.float32) / np.sqrt(
            np.asarray(lp["var"], np.float32) + BN_EPS)
        Wf = W * s[:, None, :]
        bf = (b - np.asarray(lp["mean"], np.float32)) * s + np.asarray(
            lp["beta"], np.float32)
        folded.append((Wf, bf))
    folded.append((np.asarray(params["final"]["W"], np.float32),
                   np.asarray(params["final"]["b"], np.float32)))

    fused = []
    # layer 0: shared input x -> concatenate per-task output columns
    W0 = np.concatenate([folded[0][0][t] for t in range(T)], axis=1)
    b0 = np.concatenate([folded[0][1][t] for t in range(T)], axis=0)
    fused.append((W0, b0))
    # deeper layers: block-diagonal over tasks (built once with numpy on host)
    for Wf, bf in folded[1:]:
        _, fi, fo = Wf.shape
        Wd = np.zeros((T * fi, T * fo), np.float32)
        for t in range(T):
            Wd[t * fi:(t + 1) * fi, t * fo:(t + 1) * fo] = Wf[t]
        bd = np.concatenate([bf[t] for t in range(T)], axis=0)
        fused.append((Wd, bd))

    buf = np.zeros((P_ROWS, P_COLS), np.float32)
    for (w_row, _, b_row, _), (W, b) in zip(_LAYOUT, fused):
        fi, fo = W.shape
        buf[w_row:w_row + fi, 0:fo] = W
        buf[b_row, 0:fo] = b
    return jnp.asarray(buf)            # cast to jnp.bfloat16 here for real sizes (v6e/v7x)


# ---------------------------------------------------------------------------
# Pure-numpy reference (per-task, unfolded BN) matching the PyTorch forward (eval).
# ---------------------------------------------------------------------------
def reference_forward(x, params):
    x = np.asarray(x, np.float64)
    cols = []
    for t in range(TOP_OUTPUT):
        h = x
        for lp in params["layers"]:
            z = h @ np.asarray(lp["W"][t], np.float64) + np.asarray(lp["b"][t], np.float64)
            z = ((z - np.asarray(lp["mean"][t], np.float64))
                 / np.sqrt(np.asarray(lp["var"][t], np.float64) + BN_EPS)
                 * np.asarray(lp["gamma"][t], np.float64)
                 + np.asarray(lp["beta"][t], np.float64))
            h = np.maximum(z, 0.0)                       # relu; Dropout identity in eval
        cols.append(h @ np.asarray(params["final"]["W"][t], np.float64)
                    + np.asarray(params["final"]["b"][t], np.float64))
    return np.concatenate(cols, axis=1).astype(np.float32)   # (B, top_output)


if __name__ == "__main__":
    key = jax.random.PRNGKey(0)
    key, kx, kp = jax.random.split(key, 3)
    x = jax.random.normal(kx, (BATCH, D_IN), jnp.float32)
    params = init_params(kp)
    packed = fuse_and_pack_params(params)

    out = jax.block_until_ready(top_independent_net(x, packed))
    ref = reference_forward(x, params)

    assert out.shape == (BATCH, TOP_OUTPUT), out.shape
    np.testing.assert_allclose(np.asarray(out), ref, rtol=1e-4, atol=1e-4)
    print("KERNEL_OK")
</pallas_src>

<mosaic_0001>
module attributes {stable_mosaic.version = 11 : i64} {
  func.func @_fused_mlp_kernel(%arg0: i32, %arg1: memref<8x41xf32, #tpu.memory_space<vmem>>, %arg2: memref<728x256xf32, #tpu.memory_space<vmem>>, %arg3: memref<8x128xf32, #tpu.memory_space<vmem>>) attributes {dimension_semantics = [#tpu.dimension_semantics<parallel>], iteration_bounds = array<i64: 1>, scalar_prefetch = 0 : i64, scratch_operands = 0 : i64, tpu.core_type = #tpu.core_type<tc>, window_params = [{transform_indices = @transform_0, window_bounds = array<i64: 8, 41>}, {pipeline_mode = #tpu.pipeline_mode<synchronous>, transform_indices = @transform_1, window_bounds = array<i64: 728, 256>}, {transform_indices = @transform_2, window_bounds = array<i64: 8, 128>}]} {
    %c0 = arith.constant 0 : index
    %c0_0 = arith.constant 0 : index
    %0 = vector.load %arg1[%c0, %c0_0] : memref<8x41xf32, #tpu.memory_space<vmem>>, vector<8x41xf32>
    %c0_1 = arith.constant 0 : index
    %c0_2 = arith.constant 0 : index
    %1 = vector.load %arg2[%c0_1, %c0_2] : memref<728x256xf32, #tpu.memory_space<vmem>>, vector<41x128xf32>
    %c48 = arith.constant 48 : index
    %c0_3 = arith.constant 0 : index
    %2 = vector.load %arg2[%c48, %c0_3] : memref<728x256xf32, #tpu.memory_space<vmem>>, vector<1x128xf32>
    %cst = arith.constant dense<0.000000e+00> : vector<8x128xf32>
    %3 = tpu.matmul %0, %1, %cst {dimension_numbers = #tpu.dot_dimension_numbers<[1], [0], [0], [1], [0, 0, 1, 1], [], []>} : vector<8x41xf32>, vector<41x128xf32>, vector<8x128xf32> -> vector<8x128xf32>
    %4 = vector.broadcast %2 : vector<1x128xf32> to vector<8x128xf32>
    %5 = arith.addf %3, %4 : vector<8x128xf32>
    %cst_4 = arith.constant 0.000000e+00 : f32
    %6 = vector.broadcast %cst_4 : f32 to vector<8x128xf32>
    %7 = arith.maximumf %5, %6 : vector<8x128xf32>
    %c56 = arith.constant 56 : index
    %c0_5 = arith.constant 0 : index
    %8 = vector.load %arg2[%c56, %c0_5] : memref<728x256xf32, #tpu.memory_space<vmem>>, vector<128x256xf32>
    %c184 = arith.constant 184 : index
    %c0_6 = arith.constant 0 : index
    %9 = vector.load %arg2[%c184, %c0_6] : memref<728x256xf32, #tpu.memory_space<vmem>>, vector<1x256xf32>
    %cst_7 = arith.constant dense<0.000000e+00> : vector<8x256xf32>
    %10 = tpu.matmul %7, %8, %cst_7 {dimension_numbers = #tpu.dot_dimension_numbers<[1], [0], [0], [1], [0, 0, 1, 1], [], []>} : vector<8x128xf32>, vector<128x256xf32>, vector<8x256xf32> -> vector<8x256xf32>
    %11 = vector.broadcast %9 : vector<1x256xf32> to vector<8x256xf32>
    %12 = arith.addf %10, %11 : vector<8x256xf32>
    %cst_8 = arith.constant 0.000000e+00 : f32
    %13 = vector.broadcast %cst_8 : f32 to vector<8x256xf32>
    %14 = arith.maximumf %12, %13 : vector<8x256xf32>
    %c192 = arith.constant 192 : index
    %c0_9 = arith.constant 0 : index
    %15 = vector.load %arg2[%c192, %c0_9] : memref<728x256xf32, #tpu.memory_space<vmem>>, vector<256x128xf32>
    %c448 = arith.constant 448 : index
    %c0_10 = arith.constant 0 : index
    %16 = vector.load %arg2[%c448, %c0_10] : memref<728x256xf32, #tpu.memory_space<vmem>>, vector<1x128xf32>
    %cst_11 = arith.constant dense<0.000000e+00> : vector<8x128xf32>
    %17 = tpu.matmul %14, %15, %cst_11 {dimension_numbers = #tpu.dot_dimension_numbers<[1], [0], [0], [1], [0, 0, 1, 1], [], []>} : vector<8x256xf32>, vector<256x128xf32>, vector<8x128xf32> -> vector<8x128xf32>
    %18 = vector.broadcast %16 : vector<1x128xf32> to vector<8x128xf32>
    %19 = arith.addf %17, %18 : vector<8x128xf32>
    %cst_12 = arith.constant 0.000000e+00 : f32
    %20 = vector.broadcast %cst_12 : f32 to vector<8x128xf32>
    %21 = arith.maximumf %19, %20 : vector<8x128xf32>
    %c456 = arith.constant 456 : index
    %c0_13 = arith.constant 0 : index
    %22 = vector.load %arg2[%c456, %c0_13] : memref<728x256xf32, #tpu.memory_space<vmem>>, vector<128x128xf32>
    %c584 = arith.constant 584 : index
    %c0_14 = arith.constant 0 : index
    %23 = vector.load %arg2[%c584, %c0_14] : memref<728x256xf32, #tpu.memory_space<vmem>>, vector<1x128xf32>
    %cst_15 = arith.constant dense<0.000000e+00> : vector<8x128xf32>
    %24 = tpu.matmul %21, %22, %cst_15 {dimension_numbers = #tpu.dot_dimension_numbers<[1], [0], [0], [1], [0, 0, 1, 1], [], []>} : vector<8x128xf32>, vector<128x128xf32>, vector<8x128xf32> -> vector<8x128xf32>
    %25 = vector.broadcast %23 : vector<1x128xf32> to vector<8x128xf32>
    %26 = arith.addf %24, %25 : vector<8x128xf32>
    %cst_16 = arith.constant 0.000000e+00 : f32
    %27 = vector.broadcast %cst_16 : f32 to vector<8x128xf32>
    %28 = arith.maximumf %26, %27 : vector<8x128xf32>
    %c592 = arith.constant 592 : index
    %c0_17 = arith.constant 0 : index
    %29 = vector.load %arg2[%c592, %c0_17] : memref<728x256xf32, #tpu.memory_space<vmem>>, vector<128x128xf32>
    %c720 = arith.constant 720 : index
    %c0_18 = arith.constant 0 : index
    %30 = vector.load %arg2[%c720, %c0_18] : memref<728x256xf32, #tpu.memory_space<vmem>>, vector<1x128xf32>
    %cst_19 = arith.constant dense<0.000000e+00> : vector<8x128xf32>
    %31 = tpu.matmul %28, %29, %cst_19 {dimension_numbers = #tpu.dot_dimension_numbers<[1], [0], [0], [1], [0, 0, 1, 1], [], []>} : vector<8x128xf32>, vector<128x128xf32>, vector<8x128xf32> -> vector<8x128xf32>
    %32 = vector.broadcast %30 : vector<1x128xf32> to vector<8x128xf32>
    %33 = arith.addf %31, %32 : vector<8x128xf32>
    %c0_20 = arith.constant 0 : index
    %c0_21 = arith.constant 0 : index
    %34 = vector.load %arg3[%c0_20, %c0_21] : memref<8x128xf32, #tpu.memory_space<vmem>>, vector<8x128xf32>
    tpu.vector_store %arg3[%c0_20, %c0_21], %33 {strides = array<i32>} : memref<8x128xf32, #tpu.memory_space<vmem>>, vector<8x128xf32>,
    return
  }
  func.func @transform_0(%arg0: i32) -> (i32, i32) {
    %c0_i32 = arith.constant 0 : i32
    %c0_i32_0 = arith.constant 0 : i32
    return %arg0, %c0_i32 : i32, i32
  }
  func.func @transform_1(%arg0: i32) -> (i32, i32) {
    %c0_i32 = arith.constant 0 : i32
    %c0_i32_0 = arith.constant 0 : i32
    %c0_i32_1 = arith.constant 0 : i32
    return %c0_i32, %c0_i32_0 : i32, i32
  }
  func.func @transform_2(%arg0: i32) -> (i32, i32) {
    %c0_i32 = arith.constant 0 : i32
    %c0_i32_0 = arith.constant 0 : i32
    return %arg0, %c0_i32 : i32, i32
  }
}

</mosaic_0001>

<llo_original>
// kernel: tpu_custom_call.1
$region0: #{tpu_custom_call.1}
  #allocation0 [shape = 'u32[]', space=smem, size = 0x4, offset = 0x4, fixed_abs, tag = 'smem constant byte address 0x4 - core index']
  #allocation1 [shape = 'u32[72,128]{1,0:T(1,128)}', space=vmem, size = 0x9000, scoped, tag = 'internal scratch']
  %s0 = inlined_call_operand.hbm [shape: f32[8,41], index: 0, kind: input, shape index: {}]
  %s1 = inlined_call_operand.hbm [shape: f32[728,256], index: 1, kind: input, shape index: {}]
  %s2 = inlined_call_operand.hbm [shape: f32[8,128], index: 2, kind: output, shape index: {}]
  %s3 = sld [smem:[#allocation0]]
  $region26: #{tpu_custom_call.1} parent=0
    _
  %s5 = ssub.s32 1, %s3
  %s6 = scalar_select 0, %s5, %s3
  $region1: #{tpu_custom_call.1} parent=0
    #allocation2 [shape = 'u8[4096]{0}', space=vmem, size = 0x1000, scoped, tag = 'input window, operand 0, single buffered']
    #allocation3 [shape = 's32[1]{0}', space=sflag, size = 0x4, scoped, tag = 'scoped memory for tpu_custom_call.1']
    #allocation4 [shape = 's32[1]{0}', space=sflag, size = 0x4, scoped, tag = 'scoped memory for tpu_custom_call.1']
    #allocation5 [shape = 'u8[745472]{0}', space=vmem, size = 0xb6000, scoped, tag = 'input window, operand 1, single buffered']
    #allocation6 [shape = 's32[1]{0}', space=sflag, size = 0x4, scoped, tag = 'scoped memory for tpu_custom_call.1']
    #allocation7 [shape = 'u8[4096]{0}', space=vmem, size = 0x1000, scoped, tag = 'output window, operand 0, single buffered']
    %7 = vsyncpa [#allocation3], 0
    %8 = vsyncpa [#allocation6], 0
    %9 = vsyncpa [#allocation4], 0
    // Predicated region
    $region2: #{tpu_custom_call.1} parent=1 // pred_check
      _
    $region3: #{tpu_custom_call.1} parent=1 // pred_check_branch
      %11 = sbr.rel (0) target = $region5
    $region4: #{tpu_custom_call.1} parent=1 // pred_region
      %13 = vsyncadd [#allocation3], 0
      %s15 = sshll.u32 %s0, 4
      %s16 = int_to_ptr.hbm [resolvable:$true] %s15
      %s17 = sshll.u32 [#allocation2], 4
      %s18 = int_to_ptr.vmem [resolvable:$true] %s17
      %20 = dma.hbm_to_vmem [thread:$0]  %s16, 128, %s18, [#allocation3]
    $region5: #{tpu_custom_call.1} parent=1 // pred_fallthru
      _
    // Predicated region
    $region6: #{tpu_custom_call.1} parent=1 // pred_check
      _
    $region7: #{tpu_custom_call.1} parent=1 // pred_check_branch
      %22 = sbr.rel (0) target = $region9
    $region8: #{tpu_custom_call.1} parent=1 // pred_region
      %24 = vsyncadd [#allocation6], 0
      %s25 = sshll.u32 %s1, 4
      %s26 = int_to_ptr.hbm [resolvable:$true] %s25
      %s27 = sshll.u32 [#allocation5], 4
      %s28 = int_to_ptr.vmem [resolvable:$true] %s27
      %33 = dma.hbm_to_vmem [thread:$0]  %s26, 23296, %s28, [#allocation6], 256, 256, 16
    $region9: #{tpu_custom_call.1} parent=1 // pred_fallthru
      _
    // Predicated region
    $region10: #{tpu_custom_call.1} parent=1 // pred_check
      _
    $region11: #{tpu_custom_call.1} parent=1 // pred_check_branch
      %35 = sbr.rel (0) target = $region13
    $region12: #{tpu_custom_call.1} parent=1 // pred_region
      %37 = dma.done [#allocation3], 128
    $region13: #{tpu_custom_call.1} parent=1 // pred_fallthru
      _
    // Predicated region
    $region14: #{tpu_custom_call.1} parent=1 // pred_check
      _
    $region15: #{tpu_custom_call.1} parent=1 // pred_check_branch
      %39 = sbr.rel (0) target = $region17
    $region16: #{tpu_custom_call.1} parent=1 // pred_region
      %41 = dma.done [#allocation6], 23296
    $region17: #{tpu_custom_call.1} parent=1 // pred_fallthru
      _
    %v42 = vld [vmem:[#allocation2] sm:$0xff]
    %v43 = vld [vmem:[#allocation5] sm:$0xff]
    %v44 = vld [vmem:[#allocation5 + $0x10] sm:$0xff]
    %v45 = vld [vmem:[#allocation5 + $0x20] sm:$0xff]
    %v46 = vld [vmem:[#allocation5 + $0x30] sm:$0xff]
    %v47 = vld [vmem:[#allocation5 + $0x40] sm:$0xff]
    %v48 = vld [vmem:[#allocation5 + $0x50] sm:$0x1]
    %v49 = vld [vmem:[#allocation5 + $0x60] ss:$0 sm:$0xff]
    %vm50 = vcmask 334848
    %v52 = vsel %vm50, %v42, 0
    %vm54 = vcmask 1040384
    %v56 = vsel %vm54, %v48, 0
    %58 = vmatpush.msra.mxu0 0.0
    %59 = vmatpush.msra.mxu0 0.0
    %60 = vmatpush.msra.mxu0 0.0
    %61 = vmatpush.msra.mxu0 0.0
    %62 = vmatpush.msra.mxu0 0.0
    %63 = vmatpush.msra.mxu0 0.0
    %64 = vmatpush.msra.mxu0 0.0
    %65 = vmatpush.msra.mxu0 0.0
    %66 = vmatpush.msra.mxu0 0.0
    %67 = vmatpush.msra.mxu0 0.0
    %68 = vmatpush.msra.mxu0 %v56
    %69 = vmatpush.msra.mxu0 %v47
    %70 = vmatpush.msra.mxu0 %v46
    %71 = vmatpush.msra.mxu0 %v45
    %72 = vmatpush.msra.mxu0 %v44
    %73 = vmatpush.msra.mxu0 %v43
    %74 = vmatmul.f32.gmra.mxu0 %v52
    %v75 = vpop.f32.mrf.mxu0
    %v76 = vadd.f32 %v49, %v75
    %77 = vdwg.mxu0
    %v78 = vmax.f32 %v76, 0.0
    %v79 = vld [vmem:[#allocation5 + $0x70] sm:$0xff]
    %v80 = vld [vmem:[#allocation5 + $0x78] sm:$0xff]
    %v81 = vld [vmem:[#allocation5 + $0x80] sm:$0xff]
    %v82 = vld [vmem:[#allocation5 + $0x88] sm:$0xff]
    %v83 = vld [vmem:[#allocation5 + $0x90] sm:$0xff]
    %v84 = vld [vmem:[#allocation5 + $0x98] sm:$0xff]
    %v85 = vld [vmem:[#allocation5 + $0xa0] sm:$0xff]
    %v86 = vld [vmem:[#allocation5 + $0xa8] sm:$0xff]
    %v87 = vld [vmem:[#allocation5 + $0xb0] sm:$0xff]
    %v88 = vld [vmem:[#allocation5 + $0xb8] sm:$0xff]
    %v89 = vld [vmem:[#allocation5 + $0xc0] sm:$0xff]
    %v90 = vld [vmem:[#allocation5 + $0xc8] sm:$0xff]
    %v91 = vld [vmem:[#allocation5 + $0xd0] sm:$0xff]
    %v92 = vld [vmem:[#allocation5 + $0xd8] sm:$0xff]
    %v93 = vld [vmem:[#allocation5 + $0xe0] sm:$0xff]
    %v94 = vld [vmem:[#allocation5 + $0xe8] sm:$0xff]
    %v95 = vld [vmem:[#allocation5 + $0xf0] sm:$0xff]
    %v96 = vld [vmem:[#allocation5 + $0xf8] sm:$0xff]
    %v97 = vld [vmem:[#allocation5 + $0x100] sm:$0xff]
    %v98 = vld [vmem:[#allocation5 + $0x108] sm:$0xff]
    %v99 = vld [vmem:[#allocation5 + $0x110] sm:$0xff]
    %v100 = vld [vmem:[#allocation5 + $0x118] sm:$0xff]
    %v101 = vld [vmem:[#allocation5 + $0x120] sm:$0xff]
    %v102 = vld [vmem:[#allocation5 + $0x128] sm:$0xff]
    %v103 = vld [vmem:[#allocation5 + $0x130] sm:$0xff]
    %v104 = vld [vmem:[#allocation5 + $0x138] sm:$0xff]
    %v105 = vld [vmem:[#allocation5 + $0x140] sm:$0xff]
    %v106 = vld [vmem:[#allocation5 + $0x148] sm:$0xff]
    %v107 = vld [vmem:[#allocation5 + $0x150] sm:$0xff]
    %v108 = vld [vmem:[#allocation5 + $0x158] sm:$0xff]
    %v109 = vld [vmem:[#allocation5 + $0x160] sm:$0xff]
    %v110 = vld [vmem:[#allocation5 + $0x168] sm:$0xff]
    %s111 = scalar_lea.vmem [#allocation5], 368
    %v112 = vld [vmem:[%s111] ss:$8 sm:$0x3]
    %v114 = vperm.slane %v112, 0
    %v115 = vperm.slane %v112, 1
    %118 = vmatpush.msra.mxu0 %v109
    %119 = vmatpush.msra.mxu0 %v107
    %120 = vmatpush.msra.mxu0 %v105
    %121 = vmatpush.msra.mxu0 %v103
    %122 = vmatpush.msra.mxu0 %v101
    %123 = vmatpush.msra.mxu0 %v99
    %124 = vmatpush.msra.mxu0 %v97
    %125 = vmatpush.msra.mxu0 %v95
    %126 = vmatpush.msra.mxu0 %v93
    %127 = vmatpush.msra.mxu0 %v91
    %128 = vmatpush.msra.mxu0 %v89
    %129 = vmatpush.msra.mxu0 %v87
    %130 = vmatpush.msra.mxu0 %v85
    %131 = vmatpush.msra.mxu0 %v83
    %132 = vmatpush.msra.mxu0 %v81
    %133 = vmatpush.msra.mxu0 %v79
    %134 = vmatmul.f32.gmra.mxu0 %v78
    %v135 = vpop.f32.mrf.mxu0
    %v136 = vadd.f32 %v114, %v135
    %137 = vdwg.mxu0
    %138 = vmatpush.msra.mxu0 %v110
    %139 = vmatpush.msra.mxu0 %v108
    %140 = vmatpush.msra.mxu0 %v106
    %141 = vmatpush.msra.mxu0 %v104
    %142 = vmatpush.msra.mxu0 %v102
    %143 = vmatpush.msra.mxu0 %v100
    %144 = vmatpush.msra.mxu0 %v98
    %145 = vmatpush.msra.mxu0 %v96
    %146 = vmatpush.msra.mxu0 %v94
    %147 = vmatpush.msra.mxu0 %v92
    %148 = vmatpush.msra.mxu0 %v90
    %149 = vmatpush.msra.mxu0 %v88
    %150 = vmatpush.msra.mxu0 %v86
    %151 = vmatpush.msra.mxu0 %v84
    %152 = vmatpush.msra.mxu0 %v82
    %153 = vmatpush.msra.mxu0 %v80
    %154 = vmatmul.f32.gmra.mxu0 %v78
    %v155 = vpop.f32.mrf.mxu0
    %v156 = vadd.f32 %v115, %v155
    %157 = vdwg.mxu0
    %v158 = vmax.f32 %v136, 0.0
    %v159 = vmax.f32 %v156, 0.0
    %v160 = vld [vmem:[#allocation5 + $0x180] sm:$0xff]
    %v161 = vld [vmem:[#allocation5 + $0x190] sm:$0xff]
    %v162 = vld [vmem:[#allocation5 + $0x1a0] sm:$0xff]
    %v163 = vld [vmem:[#allocation5 + $0x1b0] sm:$0xff]
    %v164 = vld [vmem:[#allocation5 + $0x1c0] sm:$0xff]
    %v165 = vld [vmem:[#allocation5 + $0x1d0] sm:$0xff]
    %v166 = vld [vmem:[#allocation5 + $0x1e0] sm:$0xff]
    %v167 = vld [vmem:[#allocation5 + $0x1f0] sm:$0xff]
    %v168 = vld [vmem:[#allocation5 + $0x200] sm:$0xff]
    %v169 = vld [vmem:[#allocation5 + $0x210] sm:$0xff]
    %v170 = vld [vmem:[#allocation5 + $0x220] sm:$0xff]
    %v171 = vld [vmem:[#allocation5 + $0x230] sm:$0xff]
    %v172 = vld [vmem:[#allocation5 + $0x240] sm:$0xff]
    %v173 = vld [vmem:[#allocation5 + $0x250] sm:$0xff]
    %v174 = vld [vmem:[#allocation5 + $0x260] sm:$0xff]
    %v175 = vld [vmem:[#allocation5 + $0x270] sm:$0xff]
    %v176 = vld [vmem:[#allocation5 + $0x280] sm:$0xff]
    %v177 = vld [vmem:[#allocation5 + $0x290] sm:$0xff]
    %v178 = vld [vmem:[#allocation5 + $0x2a0] sm:$0xff]
    %v179 = vld [vmem:[#allocation5 + $0x2b0] sm:$0xff]
    %v180 = vld [vmem:[#allocation5 + $0x2c0] sm:$0xff]
    %v181 = vld [vmem:[#allocation5 + $0x2d0] sm:$0xff]
    %v182 = vld [vmem:[#allocation5 + $0x2e0] sm:$0xff]
    %v183 = vld [vmem:[#allocation5 + $0x2f0] sm:$0xff]
    %v184 = vld [vmem:[#allocation5 + $0x300] sm:$0xff]
    %v185 = vld [vmem:[#allocation5 + $0x310] sm:$0xff]
    %v186 = vld [vmem:[#allocation5 + $0x320] sm:$0xff]
    %v187 = vld [vmem:[#allocation5 + $0x330] sm:$0xff]
    %v188 = vld [vmem:[#allocation5 + $0x340] sm:$0xff]
    %v189 = vld [vmem:[#allocation5 + $0x350] sm:$0xff]
    %v190 = vld [vmem:[#allocation5 + $0x360] sm:$0xff]
    %v191 = vld [vmem:[#allocation5 + $0x370] sm:$0xff]
    %v192 = vld [vmem:[#allocation5 + $0x380] ss:$0 sm:$0xff]
    %193 = vmatpush.msra.mxu0 %v175
    %194 = vmatpush.msra.mxu0 %v174
    %195 = vmatpush.msra.mxu0 %v173
    %196 = vmatpush.msra.mxu0 %v172
    %197 = vmatpush.msra.mxu0 %v171
    %198 = vmatpush.msra.mxu0 %v170
    %199 = vmatpush.msra.mxu0 %v169
    %200 = vmatpush.msra.mxu0 %v168
    %201 = vmatpush.msra.mxu0 %v167
    %202 = vmatpush.msra.mxu0 %v166
    %203 = vmatpush.msra.mxu0 %v165
    %204 = vmatpush.msra.mxu0 %v164
    %205 = vmatpush.msra.mxu0 %v163
    %206 = vmatpush.msra.mxu0 %v162
    %207 = vmatpush.msra.mxu0 %v161
    %208 = vmatpush.msra.mxu0 %v160
    %209 = vmatmul.f32.gmra.mxu0 %v158
    %v210 = vpop.f32.mrf.mxu0
    %v211 = vadd.f32 %v192, %v210
    %212 = vdwg.mxu0
    %213 = vmatpush.msra.mxu0 %v191
    %214 = vmatpush.msra.mxu0 %v190
    %215 = vmatpush.msra.mxu0 %v189
    %216 = vmatpush.msra.mxu0 %v188
    %217 = vmatpush.msra.mxu0 %v187
    %218 = vmatpush.msra.mxu0 %v186
    %219 = vmatpush.msra.mxu0 %v185
    %220 = vmatpush.msra.mxu0 %v184
    %221 = vmatpush.msra.mxu0 %v183
    %222 = vmatpush.msra.mxu0 %v182
    %223 = vmatpush.msra.mxu0 %v181
    %224 = vmatpush.msra.mxu0 %v180
    %225 = vmatpush.msra.mxu0 %v179
    %226 = vmatpush.msra.mxu0 %v178
    %227 = vmatpush.msra.mxu0 %v177
    %228 = vmatpush.msra.mxu0 %v176
    %229 = vmatmul.f32.gmra.mxu0 %v159
    %v230 = vpop.f32.mrf.mxu0
    %v231 = vadd.f32 %v211, %v230
    %232 = vdwg.mxu0
    %v233 = vmax.f32 %v231, 0.0
    %v234 = vld [vmem:[#allocation5 + $0x390] sm:$0xff]
    %v235 = vld [vmem:[#allocation5 + $0x3a0] sm:$0xff]
    %v236 = vld [vmem:[#allocation5 + $0x3b0] sm:$0xff]
    %v237 = vld [vmem:[#allocation5 + $0x3c0] sm:$0xff]
    %v238 = vld [vmem:[#allocation5 + $0x3d0] sm:$0xff]
    %v239 = vld [vmem:[#allocation5 + $0x3e0] sm:$0xff]
    %v240 = vld [vmem:[#allocation5 + $0x3f0] sm:$0xff]
    %v241 = vld [vmem:[#allocation5 + $0x400] sm:$0xff]
    %v242 = vld [vmem:[#allocation5 + $0x410] sm:$0xff]
    %v243 = vld [vmem:[#allocation5 + $0x420] sm:$0xff]
    %v244 = vld [vmem:[#allocation5 + $0x430] sm:$0xff]
    %v245 = vld [vmem:[#allocation5 + $0x440] sm:$0xff]
    %v246 = vld [vmem:[#allocation5 + $0x450] sm:$0xff]
    %v247 = vld [vmem:[#allocation5 + $0x460] sm:$0xff]
    %v248 = vld [vmem:[#allocation5 + $0x470] sm:$0xff]
    %v249 = vld [vmem:[#allocation5 + $0x480] sm:$0xff]
    %v250 = vld [vmem:[#allocation5 + $0x490] ss:$0 sm:$0xff]
    %251 = vmatpush.msra.mxu0 %v249
    %252 = vmatpush.msra.mxu0 %v248
    %253 = vmatpush.msra.mxu0 %v247
    %254 = vmatpush.msra.mxu0 %v246
    %255 = vmatpush.msra.mxu0 %v245
    %256 = vmatpush.msra.mxu0 %v244
    %257 = vmatpush.msra.mxu0 %v243
    %258 = vmatpush.msra.mxu0 %v242
    %259 = vmatpush.msra.mxu0 %v241
    %260 = vmatpush.msra.mxu0 %v240
    %261 = vmatpush.msra.mxu0 %v239
    %262 = vmatpush.msra.mxu0 %v238
    %263 = vmatpush.msra.mxu0 %v237
    %264 = vmatpush.msra.mxu0 %v236
    %265 = vmatpush.msra.mxu0 %v235
    %266 = vmatpush.msra.mxu0 %v234
    %267 = vmatmul.f32.gmra.mxu0 %v233
    %v268 = vpop.f32.mrf.mxu0
    %v269 = vadd.f32 %v250, %v268
    %270 = vdwg.mxu0
    %v271 = vmax.f32 %v269, 0.0
    %v272 = vld [vmem:[#allocation5 + $0x4a0] sm:$0xff]
    %v273 = vld [vmem:[#allocation5 + $0x4b0] sm:$0xff]
    %v274 = vld [vmem:[#allocation5 + $0x4c0] sm:$0xff]
    %v275 = vld [vmem:[#allocation5 + $0x4d0] sm:$0xff]
    %v276 = vld [vmem:[#allocation5 + $0x4e0] sm:$0xff]
    %v277 = vld [vmem:[#allocation5 + $0x4f0] sm:$0xff]
    %v278 = vld [vmem:[#allocation5 + $0x500] sm:$0xff]
    %v279 = vld [vmem:[#allocation5 + $0x510] sm:$0xff]
    %v280 = vld [vmem:[#allocation5 + $0x520] sm:$0xff]
    %v281 = vld [vmem:[#allocation5 + $0x530] sm:$0xff]
    %v282 = vld [vmem:[#allocation5 + $0x540] sm:$0xff]
    %v283 = vld [vmem:[#allocation5 + $0x550] sm:$0xff]
    %v284 = vld [vmem:[#allocation5 + $0x560] sm:$0xff]
    %v285 = vld [vmem:[#allocation5 + $0x570] sm:$0xff]
    %v286 = vld [vmem:[#allocation5 + $0x580] sm:$0xff]
    %v287 = vld [vmem:[#allocation5 + $0x590] sm:$0xff]
    %v288 = vld [vmem:[#allocation5 + $0x5a0] ss:$0 sm:$0xff]
    %289 = vmatpush.msra.mxu0 %v287
    %290 = vmatpush.msra.mxu0 %v286
    %291 = vmatpush.msra.mxu0 %v285
    %292 = vmatpush.msra.mxu0 %v284
    %293 = vmatpush.msra.mxu0 %v283
    %294 = vmatpush.msra.mxu0 %v282
    %295 = vmatpush.msra.mxu0 %v281
    %296 = vmatpush.msra.mxu0 %v280
    %297 = vmatpush.msra.mxu0 %v279
    %298 = vmatpush.msra.mxu0 %v278
    %299 = vmatpush.msra.mxu0 %v277
    %300 = vmatpush.msra.mxu0 %v276
    %301 = vmatpush.msra.mxu0 %v275
    %302 = vmatpush.msra.mxu0 %v274
    %303 = vmatpush.msra.mxu0 %v273
    %304 = vmatpush.msra.mxu0 %v272
    %305 = vmatmul.f32.gmra.mxu0 %v271
    %v306 = vpop.f32.mrf.mxu0
    %v307 = vadd.f32 %v288, %v306
    %308 = vdwg.mxu0
    %309 = vst [vmem:[#allocation7] sm:$0xff] %v307
    // Predicated region
    $region18: #{tpu_custom_call.1} parent=1 // pred_check
      _
    $region19: #{tpu_custom_call.1} parent=1 // pred_check_branch
      %311 = sbr.rel (0) target = $region21
    $region20: #{tpu_custom_call.1} parent=1 // pred_region
      %313 = vsyncadd [#allocation4], 0
      %s315 = sshll.u32 [#allocation7], 4
      %s316 = int_to_ptr.vmem [resolvable:$true] %s315
      %s317 = sshll.u32 %s2, 4
      %s318 = int_to_ptr.hbm [resolvable:$true] %s317
      %320 = dma.vmem_to_hbm [thread:$0]  %s316, 128, %s318, [#allocation4]
    $region21: #{tpu_custom_call.1} parent=1 // pred_fallthru
      _
    // Predicated region
    $region22: #{tpu_custom_call.1} parent=1 // pred_check
      _
    $region23: #{tpu_custom_call.1} parent=1 // pred_check_branch
      %322 = sbr.rel (0) target = $region25
    $region24: #{tpu_custom_call.1} parent=1 // pred_region
      %324 = dma.done [#allocation4], 128
    $region25: #{tpu_custom_call.1} parent=1 // pred_fallthru
      _
    %325 = vsyncpa [#allocation3], 1
    %326 = vsyncpa [#allocation6], 1
    %327 = vsyncpa [#allocation4], 1

</llo_original>
